<compile_context>
chip_gen: v5e
topology: v5e:2x2
jax: 0.10.0
libtpu: 0.0.40
codegen_flags: <defaults>
</compile_context>

<pallas_src>
import jax
import jax.numpy as jnp
from jax.experimental import pallas as pl
from jax.experimental.pallas import tpu as pltpu


def _multinoise_loss_kernel(packed_ref, out_ref):
    # packed_ref: (2, n_losses) f32 in VMEM; row 0 = losses, row 1 = eta.
    # out_ref:    (1, 1) f32 in VMEM.
    losses = packed_ref[0:1, :]                      # (1, n) static sublane slice
    eta = packed_ref[1:2, :]                         # (1, n)
    log_eta = jnp.log(eta)                           # EUP
    # losses / eta^2 == losses * exp(-2*log_eta): keeps the divide off the VALU.
    per_task = losses * jnp.exp(-2.0 * log_eta) + log_eta          # (1, n)
    out_ref[...] = jnp.sum(per_task, axis=-1, keepdims=True)       # (1, 1) XLU reduce


def _pallas_forward(packed):
    n = packed.shape[1]
    # Advisory cost: per task ~2 mul + 1 add + 1 reduce-add, and log + exp on EUP.
    cost = pl.CostEstimate(
        flops=4 * n,
        transcendentals=2 * n,
        bytes_accessed=(2 * n + 1) * 4,
    )
    return pl.pallas_call(
        _multinoise_loss_kernel,
        out_shape=jax.ShapeDtypeStruct((1, 1), jnp.float32),
        in_specs=[pl.BlockSpec(memory_space=pltpu.VMEM)],
        out_specs=pl.BlockSpec(memory_space=pltpu.VMEM),
        compiler_params=pltpu.CompilerParams(
            # Let XLA fuse the tiny stack/reshape producer into this call instead
            # of materializing a (2, n) HBM buffer just to DMA it back in.
            allow_input_fusion=[True],
        ),
        cost_estimate=cost,
    )(packed)


# --- custom_vjp so the learned noise parameters (and losses) get gradients ------
@jax.custom_vjp
def _multi_noise_total(packed):
    return _pallas_forward(packed)[0, 0]


def _multi_noise_total_fwd(packed):
    return _pallas_forward(packed)[0, 0], packed


def _multi_noise_total_bwd(packed, g):
    losses = packed[0]                               # (n,)
    eta = packed[1]                                  # (n,)
    inv_eta2 = 1.0 / (eta * eta)
    d_losses = g * inv_eta2                          # d total / d loss_i
    d_eta = g * (-2.0 * losses * inv_eta2 / eta + 1.0 / eta)  # d total / d eta_i
    return (jnp.stack([d_losses, d_eta]),)


_multi_noise_total.defvjp(_multi_noise_total_fwd, _multi_noise_total_bwd)


def multi_noise_loss(losses_list, noise_params):
    """losses_list: list of scalar (or squeezable-to-scalar) jnp arrays.
    noise_params: (n_losses,) f32 parameter vector (the learned eta_i)."""
    n = noise_params.shape[0]
    assert len(losses_list) == n
    # Glue: squeeze each loss to a scalar, stack, and pack with eta into (2, n).
    losses_vec = jnp.stack([jnp.squeeze(l).astype(jnp.float32) for l in losses_list])
    eta_vec = noise_params.astype(jnp.float32)
    packed = jnp.stack([losses_vec, eta_vec])        # (2, n) lane-major rows
    return _multi_noise_total(packed)                # scalar, like the PyTorch return


if __name__ == "__main__":
    n_losses = 4
    key = jax.random.PRNGKey(0)
    k_params, k_losses = jax.random.split(key)

    # Deterministic stand-in for torch.rand(n_losses): uniform in [0, 1),
    # kept strictly positive so 1/eta^2 and log(eta) are finite.
    noise_params = jax.random.uniform(k_params, (n_losses,), dtype=jnp.float32)
    noise_params = noise_params * 0.9 + 0.1

    # Synthetic per-task classification losses (scalars with singleton dims,
    # squeezed in the wrapper like the PyTorch forward does).
    raw = jax.random.uniform(k_losses, (n_losses,), dtype=jnp.float32) * 2.0
    losses_list = [raw[i].reshape(1, 1) for i in range(n_losses)]

    # Forward under jit (lets allow_input_fusion fuse the wrapper glue).
    total = jax.jit(multi_noise_loss)(losses_list, noise_params)
    total = jax.block_until_ready(total)

    # Reference check in plain JAX (mirrors the PyTorch loop exactly).
    ref = jnp.float32(0.0)
    for i in range(n_losses):
        ref = ref + jnp.squeeze(losses_list[i]) / (noise_params[i] ** 2) + jnp.log(noise_params[i])
    assert jnp.allclose(total, ref, rtol=1e-5, atol=1e-5), (total, ref)

    # Gradient check w.r.t. the learned noise parameters (custom_vjp path).
    g_eta = jax.jit(jax.grad(multi_noise_loss, argnums=1))(losses_list, noise_params)
    g_eta = jax.block_until_ready(g_eta)
    g_ref = -2.0 * raw / noise_params**3 + 1.0 / noise_params
    assert jnp.allclose(g_eta, g_ref, rtol=1e-4, atol=1e-5), (g_eta, g_ref)

    print("KERNEL_OK")
</pallas_src>

<mosaic_0001>
module attributes {stable_mosaic.version = 11 : i64} {
  func.func @_multinoise_loss_kernel(%arg0: memref<2x4xf32, #tpu.memory_space<vmem>>, %arg1: memref<1x1xf32, #tpu.memory_space<vmem>>) attributes {dimension_semantics = [], scalar_prefetch = 0 : i64, scratch_operands = 0 : i64, tpu.core_type = #tpu.core_type<tc>} {
    %c0 = arith.constant 0 : index
    %c0_0 = arith.constant 0 : index
    %0 = vector.load %arg0[%c0, %c0_0] : memref<2x4xf32, #tpu.memory_space<vmem>>, vector<1x4xf32>
    %c1 = arith.constant 1 : index
    %c0_1 = arith.constant 0 : index
    %1 = vector.load %arg0[%c1, %c0_1] : memref<2x4xf32, #tpu.memory_space<vmem>>, vector<1x4xf32>
    %2 = math.log %1 : vector<1x4xf32>
    %cst = arith.constant -2.000000e+00 : f32
    %3 = vector.broadcast %cst : f32 to vector<1x4xf32>
    %4 = arith.mulf %3, %2 : vector<1x4xf32>
    %5 = math.exp %4 : vector<1x4xf32>
    %6 = arith.mulf %0, %5 : vector<1x4xf32>
    %7 = arith.addf %6, %2 : vector<1x4xf32>
    %cst_2 = arith.constant dense<0.000000e+00> : vector<1xf32>
    %8 = vector.multi_reduction <add>, %7, %cst_2 [1] : vector<1x4xf32> to vector<1xf32>
    %9 = vector.shape_cast %8 : vector<1xf32> to vector<1x1xf32>
    %c0_3 = arith.constant 0 : index
    %c0_4 = arith.constant 0 : index
    %10 = vector.load %arg1[%c0_3, %c0_4] : memref<1x1xf32, #tpu.memory_space<vmem>>, vector<1x1xf32>
    tpu.vector_store %arg1[%c0_3, %c0_4], %9 {strides = array<i32>} : memref<1x1xf32, #tpu.memory_space<vmem>>, vector<1x1xf32>,
    return
  }
}

</mosaic_0001>

<llo_original>
// kernel: multi_noise_loss.2
$region0: #{multi_noise_loss.2}
  #allocation0 [shape = 'u32[]', space=smem, size = 0x4, offset = 0x4, fixed_abs, tag = 'smem constant byte address 0x4 - core index']
  #allocation1 [shape = 'u32[72,128]{1,0:T(1,128)}', space=vmem, size = 0x9000, scoped, tag = 'internal scratch']
  #allocation2 [shape = 'u32[2048]{0}', space=vmem, size = 0x2000, scoped, tag = 'scoped memory for multi_noise_loss.2']
  #allocation3 [shape = 'u32[2048]{0}', space=vmem, size = 0x2000, scoped, tag = 'scoped memory for multi_noise_loss.2']
  #allocation4 [shape = 'u32[2048]{0}', space=vmem, size = 0x2000, scoped, tag = 'scoped memory for multi_noise_loss.2']
  #allocation5 [shape = 'u32[2048]{0}', space=vmem, size = 0x2000, scoped, tag = 'scoped memory for multi_noise_loss.2']
  #allocation6 [shape = 'u32[2048]{0}', space=vmem, size = 0x2000, scoped, tag = 'scoped memory for multi_noise_loss.2']
  #allocation7 [shape = 'u32[2048]{0}', space=vmem, size = 0x2000, scoped, tag = 'scoped memory for multi_noise_loss.2']
  #allocation8 [shape = 'u32[2048]{0}', space=vmem, size = 0x2000, scoped, tag = 'scoped memory for multi_noise_loss.2']
  #allocation9 [shape = 'u32[2048]{0}', space=vmem, size = 0x2000, scoped, tag = 'scoped memory for multi_noise_loss.2']
  #allocation10 [shape = 'u32[2048]{0}', space=vmem, size = 0x2000, scoped, tag = 'scoped memory for multi_noise_loss.2']
  #allocation11 [shape = 'u32[2048]{0}', space=vmem, size = 0x2000, scoped, tag = 'scoped memory for multi_noise_loss.2']
  %s0 = inlined_call_operand.vmem [shape: f32[1,4], index: 0, kind: input, shape index: {}]
  %s1 = inlined_call_operand.<no memory space> [shape: f32[], index: 1, kind: input, shape index: {}]
  %s2 = inlined_call_operand.vmem [shape: f32[1,4], index: 2, kind: input, shape index: {}]
  %s3 = inlined_call_operand.hbm [shape: f32[1,1], index: 3, kind: output, shape index: {}]
  %s4 = sld [smem:[#allocation0]]
  $region18: #{multi_noise_loss.2} parent=0
    _
  %s6 = ssub.s32 1, %s4
  %s7 = scalar_select 0, %s6, %s4
  %v8 = vstv %s1
  %v9 = vstv %s1
  $region1: #{multi_noise_loss.2} parent=0
    #allocation12 [shape = 'u8[512]{0}', space=vmem, size = 0x400, scoped, tag = 'output window, operand 0, single buffered']
    #allocation13 [shape = 's32[1]{0}', space=sflag, size = 0x4, scoped, tag = 'scoped memory for multi_noise_loss.2']
    #allocation14 [shape = 'u8[1024]{0}', space=vmem, size = 0x400, dematerialized = true, scoped, tag = 'FusionAdapter Buffer %fusion.1 = f32[2,4]{1,0:T(2,128)} fusion(%param_0.5, %param_1.6, %param_2.2), kind=kLoop, calls=%fused_computation.1.clone, metadata={op_name="jit(multi_noise_loss)/concatenate" stack_frame_id=8}']
    %10 = vsyncpa [#allocation13], 0
    // Predicated region
    $region2: #{multi_noise_loss.2} parent=1 // pred_check
      _
    $region3: #{multi_noise_loss.2} parent=1 // pred_check_branch
      %12 = sbr.rel (0) target = $region5
    $region4: #{multi_noise_loss.2} parent=1 // pred_region
      %s14 = ssub.s32 1, 0
      %p15 = scmp.lt.s32.totalorder 0, 0
      %s16 = scalar_select %p15, 0, 0
      %s17 = scalar_lea.vmem %s0, %s16
      %s19 = ssub.s32 1, 0
    $region5: #{multi_noise_loss.2} parent=1 // pred_fallthru
      _
    // Predicated region
    $region6: #{multi_noise_loss.2} parent=1 // pred_check
      _
    $region7: #{multi_noise_loss.2} parent=1 // pred_check_branch
      %21 = sbr.rel (0) target = $region9
    $region8: #{multi_noise_loss.2} parent=1 // pred_region
      _
    $region9: #{multi_noise_loss.2} parent=1 // pred_fallthru
      _
    %s23 = ssub.s32 1, 0
    %p24 = scmp.lt.s32.totalorder 0, 0
    %s25 = scalar_select %p24, 0, 0
    %s26 = scalar_lea.vmem %s0, %s25
    %s28 = ssub.s32 1, 0
    %p29 = scmp.lt.s32.totalorder 0, 0
    %s30 = scalar_select %p29, 0, 0
    %s31 = scalar_lea.vmem %s0, %s30
    %s33 = ssub.s32 1, 0
    %s34 = ssub.s32 0, 0
    %p35 = scmp.lt.s32.totalorder %s34, 0
    %s36 = scalar_select %p35, 0, 255
    %s37 = sand.u32 1, %s36
    %s38 = sand.u32 1, %s37
    %v39 = vld [vmem:[%s31] sm:%s38]
    %v40 = vlaneseq
    %v41 = vshrl.u32 %v40, 7
    %v42 = vadd.s32 %v41, 8
    %vm43 = vcmp.lt.s32.totalorder %v42, 9
    %v44 = vsel %vm43, %v39, %v8
    %v45 = vlaneseq
    %v46 = vand.u32 %v45, 127
    %vm48 = vcmp.lt.s32.totalorder %v46, 4
    %v49 = vsel %vm48, %v44, %v8
    %vm50 = vcmask 1046528
    %v51 = vsel %vm50, %v49, %v8
    %v52 = vrot.slane %v51, 7
    %v53 = vld [vmem:[%s2] sm:$0x1]
    %v54 = vlaneseq
    %v55 = vshrl.u32 %v54, 7
    %vm57 = vcmp.lt.s32.totalorder %v55, 1
    %v58 = vsel %vm57, %v53, %v9
    %v59 = vlaneseq
    %v60 = vand.u32 %v59, 127
    %vm62 = vcmp.lt.s32.totalorder %v60, 4
    %v63 = vsel %vm62, %v58, %v9
    %64 = xla_tuple %v63, %v52
    %65 = xla_tuple %64
    %v66 = vmax.f32 %v63, %v52
    %67 = xla_tuple %v66
    %s69 = ssub.s32 4, 1
    %70 = vst [vmem:[#allocation14] sm:%s69] %v66
    %v71 = vld [vmem:[#allocation14] sm:$0x1]
    %v72 = vld [vmem:[#allocation14 + $0x1] sm:$0x1]
    %v73 = vlog2.pop %v72
    %v74 = vmul.f32 %v73, 0.6931472
    %v75 = vmul.f32 %v74, -2.0
    %v76 = vmul.f32 %v75, 1.442695
    %v77 = vpow.pop %v76
    %v78 = vmul.f32 %v71, %v77
    %v79 = vadd.f32 %v78, %v74
    %vm80 = vcmask 24576
    %v81 = vsel %vm80, %v79, 0.0
    %82 = vadd.xlane.f32.xlu0 %v81
    %v83 = vpop.xlane.xlu0 %82
    %vm84 = vcmask 0
    %85 = vst.msk [vmem:[#allocation12] sm:$0x1] %vm84, %v83
    // Predicated region
    $region10: #{multi_noise_loss.2} parent=1 // pred_check
      _
    $region11: #{multi_noise_loss.2} parent=1 // pred_check_branch
      %87 = sbr.rel (0) target = $region13
    $region12: #{multi_noise_loss.2} parent=1 // pred_region
      %89 = vsyncadd [#allocation13], 0
      %s91 = sshll.u32 [#allocation12], 4
      %s92 = int_to_ptr.vmem [resolvable:$true] %s91
      %s93 = sshll.u32 %s3, 4
      %s94 = int_to_ptr.hbm [resolvable:$true] %s93
      %96 = dma.vmem_to_hbm [thread:$0]  %s92, 16, %s94, [#allocation13]
    $region13: #{multi_noise_loss.2} parent=1 // pred_fallthru
      _
    // Predicated region
    $region14: #{multi_noise_loss.2} parent=1 // pred_check
      _
    $region15: #{multi_noise_loss.2} parent=1 // pred_check_branch
      %98 = sbr.rel (0) target = $region17
    $region16: #{multi_noise_loss.2} parent=1 // pred_region
      %100 = dma.done [#allocation13], 16
    $region17: #{multi_noise_loss.2} parent=1 // pred_fallthru
      _
    %101 = vsyncpa [#allocation13], 1

</llo_original>
